<compile_context>
chip_gen: v5e
topology: v5e:2x2
jax: 0.10.0
libtpu: 0.0.40
codegen_flags: <defaults>
</compile_context>

<pallas_src>
import jax
import jax.numpy as jnp
from jax.experimental import pallas as pl
from jax.experimental.pallas import tpu as pltpu


def _round_up(x, m):
    return (x + m - 1) // m * m


def lstm_cell_kernel(xh_ref, c_ref, w_ref, b_ref, h_out_ref, c_out_ref):
    # One fused MXU matmul over K = input_dim + output_dim, f32 accumulation.
    gates = jnp.dot(xh_ref[...], w_ref[...],
                    preferred_element_type=jnp.float32)
    gates = gates + b_ref[...].astype(jnp.float32)      # [tb, 4*D_pad]

    d = c_out_ref.shape[-1]                              # D_pad (multiple of 128)
    # 128-lane-aligned gate slices, order [i, f, o, g].
    i_g = jax.nn.sigmoid(gates[:, 0 * d:1 * d])
    f_g = jax.nn.sigmoid(gates[:, 1 * d:2 * d])
    o_g = jax.nn.sigmoid(gates[:, 2 * d:3 * d])
    g_g = jnp.tanh(gates[:, 3 * d:4 * d])

    c_new = f_g * c_ref[...].astype(jnp.float32) + i_g * g_g
    h_new = o_g * jnp.tanh(c_new)

    h_out_ref[...] = h_new.astype(h_out_ref.dtype)
    c_out_ref[...] = c_new.astype(c_out_ref.dtype)


def pack_lstm_params(params, *, compute_dtype=jnp.float32):
    """Pre-pack per-gate PyTorch-layout weights ONCE (hoisted off the step path).

    Returns:
      w: [K_pad, 4*D_pad]  fused [x|h] weight, gate columns [i, f, o, g],
         K = input_dim + output_dim padded to a multiple of 8 (sublane),
         output_dim padded to a multiple of 128 (lane).
      b: [1, 4*D_pad]      fused bias (Wx_b + Wh_b per gate), kept in f32.
    """
    out_dim, in_dim = params["Wix_w"].shape
    K = in_dim + out_dim
    K_pad = _round_up(K, 8)
    D_pad = _round_up(out_dim, 128)

    def gate_block(wx, wh):
        blk = jnp.concatenate([wx.T, wh.T], axis=0)              # [K, out]
        return jnp.pad(blk, ((0, K_pad - K), (0, D_pad - out_dim)))

    w = jnp.concatenate([
        gate_block(params["Wix_w"], params["Wih_w"]),
        gate_block(params["Wfx_w"], params["Wfh_w"]),
        gate_block(params["Wox_w"], params["Woh_w"]),
        gate_block(params["Wgx_w"], params["Wgh_w"]),
    ], axis=1).astype(compute_dtype)                              # [K_pad, 4*D_pad]

    def gate_bias(bx, bh):
        return jnp.pad(bx + bh, (0, D_pad - out_dim))

    b = jnp.concatenate([
        gate_bias(params["Wix_b"], params["Wih_b"]),
        gate_bias(params["Wfx_b"], params["Wfh_b"]),
        gate_bias(params["Wox_b"], params["Woh_b"]),
        gate_bias(params["Wgx_b"], params["Wgh_b"]),
    ], axis=0).reshape(1, 4 * D_pad).astype(jnp.float32)

    return w, b


def lstm_cell(x, h, c, packed, *, input_dim=None, output_dim=None):
    """One LSTM-cell step. Returns (h_new, c_new, h_new) like the PyTorch module.

    `packed` is the (w, b) pair from pack_lstm_params (built once, reused per call).
    """
    w, b = packed
    B, in_dim = x.shape
    out_dim = h.shape[-1]
    input_dim = in_dim if input_dim is None else input_dim
    output_dim = out_dim if output_dim is None else output_dim

    K = input_dim + output_dim
    K_pad = w.shape[0]
    D_pad = w.shape[1] // 4

    # Batch tiling: 128-row tiles when possible, always a multiple of 8 sublanes.
    tb = 128 if B >= 128 else _round_up(B, 8)
    B_pad = _round_up(B, tb)
    nb = B_pad // tb

    compute_dtype = w.dtype
    xh = jnp.concatenate([x, h], axis=1).astype(compute_dtype)
    xh = jnp.pad(xh, ((0, B_pad - B), (0, K_pad - K)))
    c_p = jnp.pad(c, ((0, B_pad - B), (0, D_pad - output_dim)))

    h_new_p, c_new_p = pl.pallas_call(
        lstm_cell_kernel,
        out_shape=(
            jax.ShapeDtypeStruct((B_pad, D_pad), x.dtype),
            jax.ShapeDtypeStruct((B_pad, D_pad), x.dtype),
        ),
        grid_spec=pltpu.PrefetchScalarGridSpec(
            num_scalar_prefetch=0,
            grid=(nb,),
            in_specs=[
                pl.BlockSpec((tb, K_pad), lambda i: (i, 0)),          # [x|h] tile
                pl.BlockSpec((tb, D_pad), lambda i: (i, 0)),          # c tile
                pl.BlockSpec((K_pad, 4 * D_pad), lambda i: (0, 0)),   # fused W (VMEM-resident)
                pl.BlockSpec((1, 4 * D_pad), lambda i: (0, 0)),       # fused bias
            ],
            out_specs=(
                pl.BlockSpec((tb, D_pad), lambda i: (i, 0)),
                pl.BlockSpec((tb, D_pad), lambda i: (i, 0)),
            ),
        ),
        compiler_params=pltpu.CompilerParams(
            dimension_semantics=("parallel",)),
    )(xh, c_p, w, b)

    h_new = h_new_p[:B, :output_dim]
    c_new = c_new_p[:B, :output_dim]
    return h_new, c_new, h_new


def init_params(key, input_dim, output_dim, dtype=jnp.float32):
    """Deterministic init mimicking nn.Linear's U(-1/sqrt(fan_in), 1/sqrt(fan_in))."""
    params = {}
    names_x = ["Wix", "Wox", "Wfx", "Wgx"]
    names_h = ["Wih", "Woh", "Wfh", "Wgh"]
    keys = jax.random.split(key, 16)
    k_iter = iter(keys)
    for name in names_x:
        bound = 1.0 / jnp.sqrt(jnp.array(input_dim, dtype))
        params[name + "_w"] = jax.random.uniform(
            next(k_iter), (output_dim, input_dim), dtype, -bound, bound)
        params[name + "_b"] = jax.random.uniform(
            next(k_iter), (output_dim,), dtype, -bound, bound)
    for name in names_h:
        bound = 1.0 / jnp.sqrt(jnp.array(output_dim, dtype))
        params[name + "_w"] = jax.random.uniform(
            next(k_iter), (output_dim, output_dim), dtype, -bound, bound)
        params[name + "_b"] = jax.random.uniform(
            next(k_iter), (output_dim,), dtype, -bound, bound)
    return params


def lstm_cell_ref(x, h, c, p):
    """Pure-JAX reference identical to the PyTorch forward."""
    lin = lambda w, b, v: v @ w.T + b
    i = jax.nn.sigmoid(lin(p["Wix_w"], p["Wix_b"], x) + lin(p["Wih_w"], p["Wih_b"], h))
    f = jax.nn.sigmoid(lin(p["Wfx_w"], p["Wfx_b"], x) + lin(p["Wfh_w"], p["Wfh_b"], h))
    o = jax.nn.sigmoid(lin(p["Wox_w"], p["Wox_b"], x) + lin(p["Woh_w"], p["Woh_b"], h))
    g = jnp.tanh(lin(p["Wgx_w"], p["Wgx_b"], x) + lin(p["Wgh_w"], p["Wgh_b"], h))
    c_new = f * c + i * g
    h_new = o * jnp.tanh(c_new)
    return h_new, c_new, h_new


if __name__ == "__main__":
    B, input_dim, output_dim = 8, 16, 32

    key = jax.random.PRNGKey(0)
    kx, kh, kc, kp = jax.random.split(key, 4)
    x = jax.random.normal(kx, (B, input_dim), jnp.float32)
    h = jax.random.normal(kh, (B, output_dim), jnp.float32)
    c = jax.random.normal(kc, (B, output_dim), jnp.float32)
    params = init_params(kp, input_dim, output_dim)

    # Pack weights once (off the per-step path). Use jnp.bfloat16 here on v6e/v7x
    # for larger problem sizes; f32 keeps the small-shape correctness check tight.
    packed = jax.tree_util.tree_map(jax.block_until_ready,
                                    pack_lstm_params(params, compute_dtype=jnp.float32))

    h_new, c_new, h_out = lstm_cell(x, h, c, packed)
    jax.block_until_ready((h_new, c_new, h_out))

    h_ref, c_ref, _ = lstm_cell_ref(x, h, c, params)
    assert jnp.allclose(h_new, h_ref, atol=1e-5, rtol=1e-5), "h mismatch"
    assert jnp.allclose(c_new, c_ref, atol=1e-5, rtol=1e-5), "c mismatch"
    assert jnp.array_equal(h_out, h_new), "third output must equal h"

    print("KERNEL_OK")
</pallas_src>

<mosaic_0001>
module attributes {stable_mosaic.version = 11 : i64} {
  func.func @lstm_cell_kernel(%arg0: i32, %arg1: memref<8x48xf32, #tpu.memory_space<vmem>>, %arg2: memref<8x128xf32, #tpu.memory_space<vmem>>, %arg3: memref<48x512xf32, #tpu.memory_space<vmem>>, %arg4: memref<1x512xf32, #tpu.memory_space<vmem>>, %arg5: memref<8x128xf32, #tpu.memory_space<vmem>>, %arg6: memref<8x128xf32, #tpu.memory_space<vmem>>) attributes {dimension_semantics = [#tpu.dimension_semantics<parallel>], iteration_bounds = array<i64: 1>, scalar_prefetch = 0 : i64, scratch_operands = 0 : i64, tpu.core_type = #tpu.core_type<tc>, window_params = [{transform_indices = @transform_0, window_bounds = array<i64: 8, 48>}, {transform_indices = @transform_1, window_bounds = array<i64: 8, 128>}, {pipeline_mode = #tpu.pipeline_mode<synchronous>, transform_indices = @transform_2, window_bounds = array<i64: 48, 512>}, {pipeline_mode = #tpu.pipeline_mode<synchronous>, transform_indices = @transform_3, window_bounds = array<i64: 1, 512>}, {transform_indices = @transform_4, window_bounds = array<i64: 8, 128>}, {transform_indices = @transform_5, window_bounds = array<i64: 8, 128>}]} {
    %c0 = arith.constant 0 : index
    %c0_0 = arith.constant 0 : index
    %0 = vector.load %arg1[%c0, %c0_0] : memref<8x48xf32, #tpu.memory_space<vmem>>, vector<8x48xf32>
    %c0_1 = arith.constant 0 : index
    %c0_2 = arith.constant 0 : index
    %1 = vector.load %arg3[%c0_1, %c0_2] : memref<48x512xf32, #tpu.memory_space<vmem>>, vector<48x512xf32>
    %cst = arith.constant dense<0.000000e+00> : vector<8x512xf32>
    %2 = tpu.matmul %0, %1, %cst {dimension_numbers = #tpu.dot_dimension_numbers<[1], [0], [0], [1], [0, 0, 1, 1], [], []>} : vector<8x48xf32>, vector<48x512xf32>, vector<8x512xf32> -> vector<8x512xf32>
    %c0_3 = arith.constant 0 : index
    %c0_4 = arith.constant 0 : index
    %3 = vector.load %arg4[%c0_3, %c0_4] : memref<1x512xf32, #tpu.memory_space<vmem>>, vector<1x512xf32>
    %4 = vector.broadcast %3 : vector<1x512xf32> to vector<8x512xf32>
    %5 = arith.addf %2, %4 : vector<8x512xf32>
    %6 = vector.extract_strided_slice %5 {offsets = [0, 0], sizes = [8, 128], strides = [1, 1]} : vector<8x512xf32> to vector<8x128xf32>
    %7 = arith.negf %6 : vector<8x128xf32>
    %8 = math.exp %7 : vector<8x128xf32>
    %cst_5 = arith.constant 1.000000e+00 : f32
    %9 = vector.broadcast %cst_5 : f32 to vector<8x128xf32>
    %10 = arith.addf %9, %8 : vector<8x128xf32>
    %11 = arith.divf %9, %10 : vector<8x128xf32>
    %12 = vector.extract_strided_slice %5 {offsets = [0, 128], sizes = [8, 128], strides = [1, 1]} : vector<8x512xf32> to vector<8x128xf32>
    %13 = arith.negf %12 : vector<8x128xf32>
    %14 = math.exp %13 : vector<8x128xf32>
    %cst_6 = arith.constant 1.000000e+00 : f32
    %15 = vector.broadcast %cst_6 : f32 to vector<8x128xf32>
    %16 = arith.addf %15, %14 : vector<8x128xf32>
    %17 = arith.divf %15, %16 : vector<8x128xf32>
    %18 = vector.extract_strided_slice %5 {offsets = [0, 256], sizes = [8, 128], strides = [1, 1]} : vector<8x512xf32> to vector<8x128xf32>
    %19 = arith.negf %18 : vector<8x128xf32>
    %20 = math.exp %19 : vector<8x128xf32>
    %cst_7 = arith.constant 1.000000e+00 : f32
    %21 = vector.broadcast %cst_7 : f32 to vector<8x128xf32>
    %22 = arith.addf %21, %20 : vector<8x128xf32>
    %23 = arith.divf %21, %22 : vector<8x128xf32>
    %24 = vector.extract_strided_slice %5 {offsets = [0, 384], sizes = [8, 128], strides = [1, 1]} : vector<8x512xf32> to vector<8x128xf32>
    %25 = math.tanh %24 : vector<8x128xf32>
    %c0_8 = arith.constant 0 : index
    %c0_9 = arith.constant 0 : index
    %26 = vector.load %arg2[%c0_8, %c0_9] : memref<8x128xf32, #tpu.memory_space<vmem>>, vector<8x128xf32>
    %27 = arith.mulf %17, %26 : vector<8x128xf32>
    %28 = arith.mulf %11, %25 : vector<8x128xf32>
    %29 = arith.addf %27, %28 : vector<8x128xf32>
    %30 = math.tanh %29 : vector<8x128xf32>
    %31 = arith.mulf %23, %30 : vector<8x128xf32>
    %c0_10 = arith.constant 0 : index
    %c0_11 = arith.constant 0 : index
    %32 = vector.load %arg5[%c0_10, %c0_11] : memref<8x128xf32, #tpu.memory_space<vmem>>, vector<8x128xf32>
    tpu.vector_store %arg5[%c0_10, %c0_11], %31 {strides = array<i32>} : memref<8x128xf32, #tpu.memory_space<vmem>>, vector<8x128xf32>,
    %c0_12 = arith.constant 0 : index
    %c0_13 = arith.constant 0 : index
    %33 = vector.load %arg6[%c0_12, %c0_13] : memref<8x128xf32, #tpu.memory_space<vmem>>, vector<8x128xf32>
    tpu.vector_store %arg6[%c0_12, %c0_13], %29 {strides = array<i32>} : memref<8x128xf32, #tpu.memory_space<vmem>>, vector<8x128xf32>,
    return
  }
  func.func @transform_0(%arg0: i32) -> (i32, i32) {
    %c0_i32 = arith.constant 0 : i32
    %c0_i32_0 = arith.constant 0 : i32
    return %arg0, %c0_i32 : i32, i32
  }
  func.func @transform_1(%arg0: i32) -> (i32, i32) {
    %c0_i32 = arith.constant 0 : i32
    %c0_i32_0 = arith.constant 0 : i32
    return %arg0, %c0_i32 : i32, i32
  }
  func.func @transform_2(%arg0: i32) -> (i32, i32) {
    %c0_i32 = arith.constant 0 : i32
    %c0_i32_0 = arith.constant 0 : i32
    %c0_i32_1 = arith.constant 0 : i32
    return %c0_i32, %c0_i32_0 : i32, i32
  }
  func.func @transform_3(%arg0: i32) -> (i32, i32) {
    %c0_i32 = arith.constant 0 : i32
    %c0_i32_0 = arith.constant 0 : i32
    %c0_i32_1 = arith.constant 0 : i32
    return %c0_i32, %c0_i32_0 : i32, i32
  }
  func.func @transform_4(%arg0: i32) -> (i32, i32) {
    %c0_i32 = arith.constant 0 : i32
    %c0_i32_0 = arith.constant 0 : i32
    return %arg0, %c0_i32 : i32, i32
  }
  func.func @transform_5(%arg0: i32) -> (i32, i32) {
    %c0_i32 = arith.constant 0 : i32
    %c0_i32_0 = arith.constant 0 : i32
    return %arg0, %c0_i32 : i32, i32
  }
}

</mosaic_0001>

<llo_original>
// kernel: tpu_custom_call.1
$region0: #{tpu_custom_call.1}
  #allocation0 [shape = 'u32[]', space=smem, size = 0x4, offset = 0x4, fixed_abs, tag = 'smem constant byte address 0x4 - core index']
  #allocation1 [shape = 'u32[72,128]{1,0:T(1,128)}', space=vmem, size = 0x9000, scoped, tag = 'internal scratch']
  %s0 = inlined_call_operand.hbm [shape: f32[8,48], index: 0, kind: input, shape index: {}]
  %s1 = inlined_call_operand.hbm [shape: f32[8,128], index: 1, kind: input, shape index: {}]
  %s2 = inlined_call_operand.hbm [shape: f32[48,512], index: 2, kind: input, shape index: {}]
  %s3 = inlined_call_operand.hbm [shape: f32[1,512], index: 3, kind: input, shape index: {}]
  %s4 = inlined_call_operand.hbm [shape: f32[8,128], index: 4, kind: output, shape index: {0}]
  %s5 = inlined_call_operand.hbm [shape: f32[8,128], index: 5, kind: output, shape index: {1}]
  %6 = xla_tuple %s4, %s5
  %s7 = sld [smem:[#allocation0]]
  $region50: #{tpu_custom_call.1} parent=0
    _
  %s9 = ssub.s32 1, %s7
  %s10 = scalar_select 0, %s9, %s7
  $region1: #{tpu_custom_call.1} parent=0
    #allocation2 [shape = 'u8[4096]{0}', space=vmem, size = 0x1000, scoped, tag = 'input window, operand 0, single buffered']
    #allocation3 [shape = 's32[1]{0}', space=sflag, size = 0x4, scoped, tag = 'scoped memory for tpu_custom_call.1']
    #allocation4 [shape = 's32[1]{0}', space=sflag, size = 0x4, scoped, tag = 'scoped memory for tpu_custom_call.1']
    #allocation5 [shape = 'u8[4096]{0}', space=vmem, size = 0x1000, scoped, tag = 'input window, operand 1, single buffered']
    #allocation6 [shape = 's32[1]{0}', space=sflag, size = 0x4, scoped, tag = 'scoped memory for tpu_custom_call.1']
    #allocation7 [shape = 'u8[98304]{0}', space=vmem, size = 0x18000, scoped, tag = 'input window, operand 2, single buffered']
    #allocation8 [shape = 'u8[2048]{0}', space=vmem, size = 0x800, scoped, tag = 'input window, operand 3, single buffered']
    #allocation9 [shape = 's32[1]{0}', space=sflag, size = 0x4, scoped, tag = 'scoped memory for tpu_custom_call.1']
    #allocation10 [shape = 'u8[4096]{0}', space=vmem, size = 0x1000, scoped, tag = 'output window, operand 0, single buffered']
    #allocation11 [shape = 'u8[4096]{0}', space=vmem, size = 0x1000, scoped, tag = 'output window, operand 1, single buffered']
    #allocation12 [shape = 's32[1]{0}', space=sflag, size = 0x4, scoped, tag = 'scoped memory for tpu_custom_call.1']
    %11 = vsyncpa [#allocation3], 0
    %12 = vsyncpa [#allocation6], 0
    %13 = vsyncpa [#allocation9], 0
    %14 = vsyncpa [#allocation4], 0
    %15 = vsyncpa [#allocation12], 0
    // Predicated region
    $region2: #{tpu_custom_call.1} parent=1 // pred_check
      _
    $region3: #{tpu_custom_call.1} parent=1 // pred_check_branch
      %17 = sbr.rel (0) target = $region5
    $region4: #{tpu_custom_call.1} parent=1 // pred_region
      %19 = vsyncadd [#allocation3], 0
      %s21 = sshll.u32 %s0, 4
      %s22 = int_to_ptr.hbm [resolvable:$true] %s21
      %s23 = sshll.u32 [#allocation2], 4
      %s24 = int_to_ptr.vmem [resolvable:$true] %s23
      %26 = dma.hbm_to_vmem [thread:$0]  %s22, 128, %s24, [#allocation3]
    $region5: #{tpu_custom_call.1} parent=1 // pred_fallthru
      _
    // Predicated region
    $region6: #{tpu_custom_call.1} parent=1 // pred_check
      _
    $region7: #{tpu_custom_call.1} parent=1 // pred_check_branch
      %28 = sbr.rel (0) target = $region9
    $region8: #{tpu_custom_call.1} parent=1 // pred_region
      %30 = vsyncadd [#allocation6], 0
      %s32 = sshll.u32 %s1, 4
      %s33 = int_to_ptr.hbm [resolvable:$true] %s32
      %s34 = sshll.u32 [#allocation5], 4
      %s35 = int_to_ptr.vmem [resolvable:$true] %s34
      %37 = dma.hbm_to_vmem [thread:$0]  %s33, 128, %s35, [#allocation6]
    $region9: #{tpu_custom_call.1} parent=1 // pred_fallthru
      _
    // Predicated region
    $region10: #{tpu_custom_call.1} parent=1 // pred_check
      _
    $region11: #{tpu_custom_call.1} parent=1 // pred_check_branch
      %39 = sbr.rel (0) target = $region13
    $region12: #{tpu_custom_call.1} parent=1 // pred_region
      %41 = vsyncadd [#allocation6], 0
      %s42 = sshll.u32 %s2, 4
      %s43 = int_to_ptr.hbm [resolvable:$true] %s42
      %s44 = sshll.u32 [#allocation7], 4
      %s45 = int_to_ptr.vmem [resolvable:$true] %s44
      %50 = dma.hbm_to_vmem [thread:$0]  %s43, 3072, %s45, [#allocation6], 512, 512, 32
    $region13: #{tpu_custom_call.1} parent=1 // pred_fallthru
      _
    // Predicated region
    $region14: #{tpu_custom_call.1} parent=1 // pred_check
      _
    $region15: #{tpu_custom_call.1} parent=1 // pred_check_branch
      %52 = sbr.rel (0) target = $region17
    $region16: #{tpu_custom_call.1} parent=1 // pred_region
      %54 = vsyncadd [#allocation9], 0
      %s56 = sshll.u32 %s3, 4
      %s57 = int_to_ptr.hbm [resolvable:$true] %s56
      %s58 = sshll.u32 [#allocation8], 4
      %s59 = int_to_ptr.vmem [resolvable:$true] %s58
      %61 = dma.hbm_to_vmem [thread:$0]  %s57, 64, %s59, [#allocation9]
    $region17: #{tpu_custom_call.1} parent=1 // pred_fallthru
      _
    // Predicated region
    $region18: #{tpu_custom_call.1} parent=1 // pred_check
      _
    $region19: #{tpu_custom_call.1} parent=1 // pred_check_branch
      %63 = sbr.rel (0) target = $region21
    $region20: #{tpu_custom_call.1} parent=1 // pred_region
      %65 = dma.done [#allocation3], 128
    $region21: #{tpu_custom_call.1} parent=1 // pred_fallthru
      _
    // Predicated region
    $region22: #{tpu_custom_call.1} parent=1 // pred_check
      _
    $region23: #{tpu_custom_call.1} parent=1 // pred_check_branch
      %67 = sbr.rel (0) target = $region25
    $region24: #{tpu_custom_call.1} parent=1 // pred_region
      %69 = dma.done [#allocation6], 128
    $region25: #{tpu_custom_call.1} parent=1 // pred_fallthru
      _
    // Predicated region
    $region26: #{tpu_custom_call.1} parent=1 // pred_check
      _
    $region27: #{tpu_custom_call.1} parent=1 // pred_check_branch
      %71 = sbr.rel (0) target = $region29
    $region28: #{tpu_custom_call.1} parent=1 // pred_region
      %73 = dma.done [#allocation6], 3072
    $region29: #{tpu_custom_call.1} parent=1 // pred_fallthru
      _
    // Predicated region
    $region30: #{tpu_custom_call.1} parent=1 // pred_check
      _
    $region31: #{tpu_custom_call.1} parent=1 // pred_check_branch
      %75 = sbr.rel (0) target = $region33
    $region32: #{tpu_custom_call.1} parent=1 // pred_region
      %77 = dma.done [#allocation9], 64
    $region33: #{tpu_custom_call.1} parent=1 // pred_fallthru
      _
    %v78 = vld [vmem:[#allocation2] sm:$0xff]
    %v79 = vld [vmem:[#allocation7] sm:$0xff]
    %v80 = vld [vmem:[#allocation7 + $0x8] sm:$0xff]
    %v81 = vld [vmem:[#allocation7 + $0x10] sm:$0xff]
    %v82 = vld [vmem:[#allocation7 + $0x18] sm:$0xff]
    %v83 = vld [vmem:[#allocation7 + $0x20] sm:$0xff]
    %v84 = vld [vmem:[#allocation7 + $0x28] sm:$0xff]
    %v85 = vld [vmem:[#allocation7 + $0x30] sm:$0xff]
    %v86 = vld [vmem:[#allocation7 + $0x38] sm:$0xff]
    %v87 = vld [vmem:[#allocation7 + $0x40] sm:$0xff]
    %v88 = vld [vmem:[#allocation7 + $0x48] sm:$0xff]
    %v89 = vld [vmem:[#allocation7 + $0x50] sm:$0xff]
    %v90 = vld [vmem:[#allocation7 + $0x58] sm:$0xff]
    %v91 = vld [vmem:[#allocation7 + $0x60] sm:$0xff]
    %v92 = vld [vmem:[#allocation7 + $0x68] sm:$0xff]
    %v93 = vld [vmem:[#allocation7 + $0x70] sm:$0xff]
    %v94 = vld [vmem:[#allocation7 + $0x78] sm:$0xff]
    %v95 = vld [vmem:[#allocation7 + $0x80] sm:$0xff]
    %v96 = vld [vmem:[#allocation7 + $0x88] sm:$0xff]
    %v97 = vld [vmem:[#allocation7 + $0x90] sm:$0xff]
    %v98 = vld [vmem:[#allocation7 + $0x98] sm:$0xff]
    %v99 = vld [vmem:[#allocation7 + $0xa0] sm:$0xff]
    %v100 = vld [vmem:[#allocation7 + $0xa8] sm:$0xff]
    %v101 = vld [vmem:[#allocation7 + $0xb0] sm:$0xff]
    %v102 = vld [vmem:[#allocation7 + $0xb8] sm:$0xff]
    %v103 = vld [vmem:[#allocation8] sm:$0xf]
    %v105 = vperm.slane %v103, 0
    %v106 = vperm.slane %v103, 1
    %v107 = vperm.slane %v103, 2
    %v108 = vperm.slane %v103, 3
    %vm113 = vcmask 392192
    %v115 = vsel %vm113, %v78, 0
    %117 = vmatpush.msra.mxu0 0.0
    %118 = vmatpush.msra.mxu0 0.0
    %119 = vmatpush.msra.mxu0 0.0
    %120 = vmatpush.msra.mxu0 0.0
    %121 = vmatpush.msra.mxu0 0.0
    %122 = vmatpush.msra.mxu0 0.0
    %123 = vmatpush.msra.mxu0 0.0
    %124 = vmatpush.msra.mxu0 0.0
    %125 = vmatpush.msra.mxu0 0.0
    %126 = vmatpush.msra.mxu0 0.0
    %127 = vmatpush.msra.mxu0 %v99
    %128 = vmatpush.msra.mxu0 %v95
    %129 = vmatpush.msra.mxu0 %v91
    %130 = vmatpush.msra.mxu0 %v87
    %131 = vmatpush.msra.mxu0 %v83
    %132 = vmatpush.msra.mxu0 %v79
    %133 = vmatmul.f32.gmra.mxu0 %v115
    %v134 = vpop.f32.mrf.mxu0
    %v135 = vadd.f32 %v105, %v134
    %136 = vdwg.mxu0
    %137 = vmatpush.msra.mxu0 0.0
    %138 = vmatpush.msra.mxu0 0.0
    %139 = vmatpush.msra.mxu0 0.0
    %140 = vmatpush.msra.mxu0 0.0
    %141 = vmatpush.msra.mxu0 0.0
    %142 = vmatpush.msra.mxu0 0.0
    %143 = vmatpush.msra.mxu0 0.0
    %144 = vmatpush.msra.mxu0 0.0
    %145 = vmatpush.msra.mxu0 0.0
    %146 = vmatpush.msra.mxu0 0.0
    %147 = vmatpush.msra.mxu0 %v100
    %148 = vmatpush.msra.mxu0 %v96
    %149 = vmatpush.msra.mxu0 %v92
    %150 = vmatpush.msra.mxu0 %v88
    %151 = vmatpush.msra.mxu0 %v84
    %152 = vmatpush.msra.mxu0 %v80
    %153 = vmatmul.f32.gmra.mxu0 %v115
    %v154 = vpop.f32.mrf.mxu0
    %v155 = vadd.f32 %v106, %v154
    %156 = vdwg.mxu0
    %157 = vmatpush.msra.mxu0 0.0
    %158 = vmatpush.msra.mxu0 0.0
    %159 = vmatpush.msra.mxu0 0.0
    %160 = vmatpush.msra.mxu0 0.0
    %161 = vmatpush.msra.mxu0 0.0
    %162 = vmatpush.msra.mxu0 0.0
    %163 = vmatpush.msra.mxu0 0.0
    %164 = vmatpush.msra.mxu0 0.0
    %165 = vmatpush.msra.mxu0 0.0
    %166 = vmatpush.msra.mxu0 0.0
    %167 = vmatpush.msra.mxu0 %v101
    %168 = vmatpush.msra.mxu0 %v97
    %169 = vmatpush.msra.mxu0 %v93
    %170 = vmatpush.msra.mxu0 %v89
    %171 = vmatpush.msra.mxu0 %v85
    %172 = vmatpush.msra.mxu0 %v81
    %173 = vmatmul.f32.gmra.mxu0 %v115
    %v174 = vpop.f32.mrf.mxu0
    %v175 = vadd.f32 %v107, %v174
    %176 = vdwg.mxu0
    %177 = vmatpush.msra.mxu0 0.0
    %178 = vmatpush.msra.mxu0 0.0
    %179 = vmatpush.msra.mxu0 0.0
    %180 = vmatpush.msra.mxu0 0.0
    %181 = vmatpush.msra.mxu0 0.0
    %182 = vmatpush.msra.mxu0 0.0
    %183 = vmatpush.msra.mxu0 0.0
    %184 = vmatpush.msra.mxu0 0.0
    %185 = vmatpush.msra.mxu0 0.0
    %186 = vmatpush.msra.mxu0 0.0
    %187 = vmatpush.msra.mxu0 %v102
    %188 = vmatpush.msra.mxu0 %v98
    %189 = vmatpush.msra.mxu0 %v94
    %190 = vmatpush.msra.mxu0 %v90
    %191 = vmatpush.msra.mxu0 %v86
    %192 = vmatpush.msra.mxu0 %v82
    %193 = vmatmul.f32.gmra.mxu0 %v115
    %v194 = vpop.f32.mrf.mxu0
    %v195 = vadd.f32 %v108, %v194
    %196 = vdwg.mxu0
    %v197 = vxor.u32 %v135, 2147483648
    %v198 = vmul.f32 %v197, 1.442695
    %v199 = vpow.pop %v198
    %v200 = vadd.f32 %v199, 1.0
    %v201 = vrcp.pop %v200
    %v202 = vmul.f32 %v200, %v201
    %v203 = vsub.f32 1.0, %v202
    %v204 = vmul.f32 %v201, %v203
    %v205 = vadd.f32 %v201, %v204
    %vm206 = vweird.f32 %v200
    %vm207 = vweird.f32 %v201
    %vm208 = vmor %vm206, %vm207
    %v209 = vsel %vm208, %v201, %v205
    %v210 = vand.u32 2147483647, %v200
    %vm211 = vcmp.eq.f32.partialorder %v210, 8.507059e+37
    %v212 = vand.u32 %v200, 2147483648
    %v213 = vor.u32 1.1754944e-38, %v212
    %v214 = vsel %vm211, %v213, %v209
    %v215 = vmul.f32 1.0, %v214
    %v216 = vxor.u32 %v155, 2147483648
    %v217 = vmul.f32 %v216, 1.442695
    %v218 = vpow.pop %v217
    %v219 = vadd.f32 %v218, 1.0
    %v220 = vrcp.pop %v219
    %v221 = vmul.f32 %v219, %v220
    %v222 = vsub.f32 1.0, %v221
    %v223 = vmul.f32 %v220, %v222
    %v224 = vadd.f32 %v220, %v223
    %vm225 = vweird.f32 %v219
    %vm226 = vweird.f32 %v220
    %vm227 = vmor %vm225, %vm226
    %v228 = vsel %vm227, %v220, %v224
    %v229 = vand.u32 2147483647, %v219
    %vm230 = vcmp.eq.f32.partialorder %v229, 8.507059e+37
    %v231 = vand.u32 %v219, 2147483648
    %v232 = vor.u32 1.1754944e-38, %v231
    %v233 = vsel %vm230, %v232, %v228
    %v234 = vmul.f32 1.0, %v233
    %v235 = vxor.u32 %v175, 2147483648
    %v236 = vmul.f32 %v235, 1.442695
    %v237 = vpow.pop %v236
    %v238 = vadd.f32 %v237, 1.0
    %v239 = vrcp.pop %v238
    %v240 = vmul.f32 %v238, %v239
    %v241 = vsub.f32 1.0, %v240
    %v242 = vmul.f32 %v239, %v241
    %v243 = vadd.f32 %v239, %v242
    %vm244 = vweird.f32 %v238
    %vm245 = vweird.f32 %v239
    %vm246 = vmor %vm244, %vm245
    %v247 = vsel %vm246, %v239, %v243
    %v248 = vand.u32 2147483647, %v238
    %vm249 = vcmp.eq.f32.partialorder %v248, 8.507059e+37
    %v250 = vand.u32 %v238, 2147483648
    %v251 = vor.u32 1.1754944e-38, %v250
    %v252 = vsel %vm249, %v251, %v247
    %v253 = vmul.f32 1.0, %v252
    %v254 = vtanh.pop %v195
    %v255 = vld [vmem:[#allocation5] sm:$0xff]
    %v256 = vmul.f32 %v234, %v255
    %v257 = vmul.f32 %v215, %v254
    %v258 = vadd.f32 %v256, %v257
    %v259 = vtanh.pop %v258
    %v260 = vmul.f32 %v253, %v259
    %261 = vst [vmem:[#allocation10] sm:$0xff] %v260
    %262 = vst [vmem:[#allocation11] sm:$0xff] %v258
    // Predicated region
    $region34: #{tpu_custom_call.1} parent=1 // pred_check
      _
    $region35: #{tpu_custom_call.1} parent=1 // pred_check_branch
      %264 = sbr.rel (0) target = $region37
    $region36: #{tpu_custom_call.1} parent=1 // pred_region
      %266 = vsyncadd [#allocation4], 0
      %s268 = sshll.u32 [#allocation10], 4
      %s269 = int_to_ptr.vmem [resolvable:$true] %s268
      %s270 = sshll.u32 %s4, 4
      %s271 = int_to_ptr.hbm [resolvable:$true] %s270
      %273 = dma.vmem_to_hbm [thread:$0]  %s269, 128, %s271, [#allocation4]
    $region37: #{tpu_custom_call.1} parent=1 // pred_fallthru
      _
    // Predicated region
    $region38: #{tpu_custom_call.1} parent=1 // pred_check
      _
    $region39: #{tpu_custom_call.1} parent=1 // pred_check_branch
      %275 = sbr.rel (0) target = $region41
    $region40: #{tpu_custom_call.1} parent=1 // pred_region
      %277 = vsyncadd [#allocation12], 0
      %s279 = sshll.u32 [#allocation11], 4
      %s280 = int_to_ptr.vmem [resolvable:$true] %s279
      %s281 = sshll.u32 %s5, 4
      %s282 = int_to_ptr.hbm [resolvable:$true] %s281
      %284 = dma.vmem_to_hbm [thread:$0]  %s280, 128, %s282, [#allocation12]
    $region41: #{tpu_custom_call.1} parent=1 // pred_fallthru
      _
    // Predicated region
    $region42: #{tpu_custom_call.1} parent=1 // pred_check
      _
    $region43: #{tpu_custom_call.1} parent=1 // pred_check_branch
      %286 = sbr.rel (0) target = $region45
    $region44: #{tpu_custom_call.1} parent=1 // pred_region
      %288 = dma.done [#allocation4], 128
    $region45: #{tpu_custom_call.1} parent=1 // pred_fallthru
      _
    // Predicated region
    $region46: #{tpu_custom_call.1} parent=1 // pred_check
      _
    $region47: #{tpu_custom_call.1} parent=1 // pred_check_branch
      %290 = sbr.rel (0) target = $region49
    $region48: #{tpu_custom_call.1} parent=1 // pred_region
      %292 = dma.done [#allocation12], 128
    $region49: #{tpu_custom_call.1} parent=1 // pred_fallthru
      _
    %293 = vsyncpa [#allocation3], 1
    %294 = vsyncpa [#allocation6], 1
    %295 = vsyncpa [#allocation9], 1
    %296 = vsyncpa [#allocation4], 1
    %297 = vsyncpa [#allocation12], 1

</llo_original>
